<compile_context>
chip_gen: v6e
topology: v6e:2x2x1
jax: 0.10.0
libtpu: 0.0.40
codegen_flags: <defaults>
</compile_context>

<pallas_src>
import functools

import jax
import jax.numpy as jnp
from jax.experimental import pallas as pl
from jax.experimental.pallas import tpu as pltpu

CHANNEL = 26
HIDDEN = 50


def _mlp_kernel(x_ref,
                w1_ref, b1_ref,
                w2_ref, b2_ref,
                w3_ref, b3_ref,
                w4_ref, b4_ref,
                w5_ref, b5_ref,
                o_ref):
    # x_ref: (CHANNEL, TB)  -- features on sublanes, batch on lanes.
    # Five tiny matmuls on the MXU + bias-add / ReLU on the VPU; the output
    # store is lane-dense (last dim = TB, a multiple of 128).
    h = x_ref[...]  # already f32, no cast needed

    h = jnp.dot(w1_ref[...], h, preferred_element_type=jnp.float32) + b1_ref[...]
    h = jnp.maximum(h, 0.0)

    h = jnp.dot(w2_ref[...], h, preferred_element_type=jnp.float32) + b2_ref[...]
    h = jnp.maximum(h, 0.0)

    h = jnp.dot(w3_ref[...], h, preferred_element_type=jnp.float32) + b3_ref[...]
    h = jnp.maximum(h, 0.0)

    h = jnp.dot(w4_ref[...], h, preferred_element_type=jnp.float32) + b4_ref[...]
    h = jnp.maximum(h, 0.0)

    h = jnp.dot(w5_ref[...], h, preferred_element_type=jnp.float32) + b5_ref[...]

    o_ref[...] = h.astype(o_ref.dtype)


def _choose_tb(b):
    """Lane-dense batch tile: multiple of 128, capped at 1024 rows/tile.

    1024 columns of padded-f32 activations keeps 2x double-buffered
    (x tile + out tile) well under v7x's 32 MiB scoped-VMEM default while
    amortizing the ~0.35 us per-grid-step overhead.
    """
    tb = ((b + 127) // 128) * 128
    return max(128, min(tb, 1024))


@jax.jit
def mymodel_forward(x, params):
    """x: (B, C, 1) float32  ->  (B, C, 1) float32."""
    B = x.shape[0]
    x2d = x.reshape(B, -1)                      # x.view(x.size(0), -1) -> (B, C)

    # Layout plumbing (trace-time shapes, one transpose + pad in the wrapper):
    TB = _choose_tb(B)
    n_tiles = pl.cdiv(B, TB)
    B_pad = n_tiles * TB
    x_t = x2d.T                                  # (C, B)
    if B_pad != B:
        x_t = jnp.pad(x_t, ((0, 0), (0, B_pad - B)))

    (w1, b1), (w2, b2), (w3, b3), (w4, b4), (w5, b5) = params

    # Weights/biases: full-extent resident blocks (constant index_map).
    def _full(arr):
        return pl.BlockSpec(arr.shape, lambda i: (0, 0))

    out_t = pl.pallas_call(
        _mlp_kernel,
        out_shape=jax.ShapeDtypeStruct((CHANNEL, B_pad), jnp.float32),
        grid=(n_tiles,),
        in_specs=[
            pl.BlockSpec((CHANNEL, TB), lambda i: (0, i)),   # x tile
            _full(w1), _full(b1),
            _full(w2), _full(b2),
            _full(w3), _full(b3),
            _full(w4), _full(b4),
            _full(w5), _full(b5),
        ],
        out_specs=pl.BlockSpec((CHANNEL, TB), lambda i: (0, i)),
        compiler_params=pltpu.CompilerParams(
            dimension_semantics=("parallel",),               # megacore on v7x
        ),
    )(x_t,
      w1, b1, w2, b2, w3, b3, w4, b4, w5, b5)

    out2d = out_t[:, :B].T                       # (B, C)
    # x.view(x.size(0), x.size(1), 1)
    return out2d.reshape(B, CHANNEL, 1)


def init_params(key, channel=CHANNEL, hidden=HIDDEN):
    """PyTorch-style uniform(-1/sqrt(fan_in), 1/sqrt(fan_in)) init.

    Weights stored as (out_features, in_features) -- the PyTorch layout --
    biases as (out_features, 1) so they broadcast over the lane (batch) axis
    inside the kernel.  Forward math: y = W @ x + b  ==  nn.Linear(x).
    """
    dims = [(channel, hidden), (hidden, hidden), (hidden, hidden),
            (hidden, hidden), (hidden, channel)]
    params = []
    for (fan_in, fan_out) in dims:
        key, kw, kb = jax.random.split(key, 3)
        bound = 1.0 / jnp.sqrt(fan_in)
        w = jax.random.uniform(kw, (fan_out, fan_in), jnp.float32, -bound, bound)
        b = jax.random.uniform(kb, (fan_out, 1), jnp.float32, -bound, bound)
        params.append((w, b))
    return tuple(params)


def _reference_forward(x, params):
    """Pure-JAX reference matching the PyTorch forward."""
    B = x.shape[0]
    h = x.reshape(B, -1).T                       # (C, B)
    (w1, b1), (w2, b2), (w3, b3), (w4, b4), (w5, b5) = params
    h = jnp.maximum(w1 @ h + b1, 0.0)
    h = jnp.maximum(w2 @ h + b2, 0.0)
    h = jnp.maximum(w3 @ h + b3, 0.0)
    h = jnp.maximum(w4 @ h + b4, 0.0)
    h = w5 @ h + b5
    return h.T.reshape(B, CHANNEL, 1)


if __name__ == "__main__":
    key = jax.random.PRNGKey(0)
    key, kx = jax.random.split(key)

    B = 8
    x = jax.random.normal(kx, (B, CHANNEL, 1), jnp.float32)

    params = init_params(key)

    out = mymodel_forward(x, params)
    out = jax.block_until_ready(out)

    ref = _reference_forward(x, params)
    assert out.shape == (B, CHANNEL, 1), out.shape
    assert jnp.allclose(out, ref, atol=1e-5, rtol=1e-5), "mismatch vs reference"

    # Also exercise a non-multiple-of-tile, multi-tile batch path.
    key, kx2 = jax.random.split(key)
    B2 = 300
    x2 = jax.random.normal(kx2, (B2, CHANNEL, 1), jnp.float32)
    out2 = jax.block_until_ready(mymodel_forward(x2, params))
    ref2 = _reference_forward(x2, params)
    assert out2.shape == (B2, CHANNEL, 1), out2.shape
    assert jnp.allclose(out2, ref2, atol=1e-5, rtol=1e-5), "mismatch vs reference (B=300)"

    print("KERNEL_OK")
</pallas_src>

<mosaic_0001>
module attributes {stable_mosaic.version = 11 : i64} {
  func.func @_mlp_kernel(%arg0: i32, %arg1: memref<26x128xf32, #tpu.memory_space<vmem>>, %arg2: memref<50x26xf32, #tpu.memory_space<vmem>>, %arg3: memref<50x1xf32, #tpu.memory_space<vmem>>, %arg4: memref<50x50xf32, #tpu.memory_space<vmem>>, %arg5: memref<50x1xf32, #tpu.memory_space<vmem>>, %arg6: memref<50x50xf32, #tpu.memory_space<vmem>>, %arg7: memref<50x1xf32, #tpu.memory_space<vmem>>, %arg8: memref<50x50xf32, #tpu.memory_space<vmem>>, %arg9: memref<50x1xf32, #tpu.memory_space<vmem>>, %arg10: memref<26x50xf32, #tpu.memory_space<vmem>>, %arg11: memref<26x1xf32, #tpu.memory_space<vmem>>, %arg12: memref<26x128xf32, #tpu.memory_space<vmem>>) attributes {dimension_semantics = [#tpu.dimension_semantics<parallel>], iteration_bounds = array<i64: 1>, scalar_prefetch = 0 : i64, scratch_operands = 0 : i64, tpu.core_type = #tpu.core_type<tc>, window_params = [{transform_indices = @transform_0, window_bounds = array<i64: 26, 128>}, {pipeline_mode = #tpu.pipeline_mode<synchronous>, transform_indices = @transform_1, window_bounds = array<i64: 50, 26>}, {pipeline_mode = #tpu.pipeline_mode<synchronous>, transform_indices = @transform_2, window_bounds = array<i64: 50, 1>}, {pipeline_mode = #tpu.pipeline_mode<synchronous>, transform_indices = @transform_3, window_bounds = array<i64: 50, 50>}, {pipeline_mode = #tpu.pipeline_mode<synchronous>, transform_indices = @transform_4, window_bounds = array<i64: 50, 1>}, {pipeline_mode = #tpu.pipeline_mode<synchronous>, transform_indices = @transform_5, window_bounds = array<i64: 50, 50>}, {pipeline_mode = #tpu.pipeline_mode<synchronous>, transform_indices = @transform_6, window_bounds = array<i64: 50, 1>}, {pipeline_mode = #tpu.pipeline_mode<synchronous>, transform_indices = @transform_7, window_bounds = array<i64: 50, 50>}, {pipeline_mode = #tpu.pipeline_mode<synchronous>, transform_indices = @transform_8, window_bounds = array<i64: 50, 1>}, {pipeline_mode = #tpu.pipeline_mode<synchronous>, transform_indices = @transform_9, window_bounds = array<i64: 26, 50>}, {pipeline_mode = #tpu.pipeline_mode<synchronous>, transform_indices = @transform_10, window_bounds = array<i64: 26, 1>}, {transform_indices = @transform_11, window_bounds = array<i64: 26, 128>}]} {
    %c0 = arith.constant 0 : index
    %c0_0 = arith.constant 0 : index
    %0 = vector.load %arg1[%c0, %c0_0] : memref<26x128xf32, #tpu.memory_space<vmem>>, vector<26x128xf32>
    %c0_1 = arith.constant 0 : index
    %c0_2 = arith.constant 0 : index
    %1 = vector.load %arg2[%c0_1, %c0_2] : memref<50x26xf32, #tpu.memory_space<vmem>>, vector<50x26xf32>
    %cst = arith.constant dense<0.000000e+00> : vector<50x128xf32>
    %2 = tpu.matmul %1, %0, %cst {dimension_numbers = #tpu.dot_dimension_numbers<[1], [0], [0], [1], [0, 0, 1, 1], [], []>} : vector<50x26xf32>, vector<26x128xf32>, vector<50x128xf32> -> vector<50x128xf32>
    %c0_3 = arith.constant 0 : index
    %c0_4 = arith.constant 0 : index
    %3 = vector.load %arg3[%c0_3, %c0_4] : memref<50x1xf32, #tpu.memory_space<vmem>>, vector<50x1xf32>
    %4 = vector.broadcast %3 : vector<50x1xf32> to vector<50x128xf32>
    %5 = arith.addf %2, %4 : vector<50x128xf32>
    %cst_5 = arith.constant 0.000000e+00 : f32
    %6 = vector.broadcast %cst_5 : f32 to vector<50x128xf32>
    %7 = arith.maximumf %5, %6 : vector<50x128xf32>
    %c0_6 = arith.constant 0 : index
    %c0_7 = arith.constant 0 : index
    %8 = vector.load %arg4[%c0_6, %c0_7] : memref<50x50xf32, #tpu.memory_space<vmem>>, vector<50x50xf32>
    %cst_8 = arith.constant dense<0.000000e+00> : vector<50x128xf32>
    %9 = tpu.matmul %8, %7, %cst_8 {dimension_numbers = #tpu.dot_dimension_numbers<[1], [0], [0], [1], [0, 0, 1, 1], [], []>} : vector<50x50xf32>, vector<50x128xf32>, vector<50x128xf32> -> vector<50x128xf32>
    %c0_9 = arith.constant 0 : index
    %c0_10 = arith.constant 0 : index
    %10 = vector.load %arg5[%c0_9, %c0_10] : memref<50x1xf32, #tpu.memory_space<vmem>>, vector<50x1xf32>
    %11 = vector.broadcast %10 : vector<50x1xf32> to vector<50x128xf32>
    %12 = arith.addf %9, %11 : vector<50x128xf32>
    %cst_11 = arith.constant 0.000000e+00 : f32
    %13 = vector.broadcast %cst_11 : f32 to vector<50x128xf32>
    %14 = arith.maximumf %12, %13 : vector<50x128xf32>
    %c0_12 = arith.constant 0 : index
    %c0_13 = arith.constant 0 : index
    %15 = vector.load %arg6[%c0_12, %c0_13] : memref<50x50xf32, #tpu.memory_space<vmem>>, vector<50x50xf32>
    %cst_14 = arith.constant dense<0.000000e+00> : vector<50x128xf32>
    %16 = tpu.matmul %15, %14, %cst_14 {dimension_numbers = #tpu.dot_dimension_numbers<[1], [0], [0], [1], [0, 0, 1, 1], [], []>} : vector<50x50xf32>, vector<50x128xf32>, vector<50x128xf32> -> vector<50x128xf32>
    %c0_15 = arith.constant 0 : index
    %c0_16 = arith.constant 0 : index
    %17 = vector.load %arg7[%c0_15, %c0_16] : memref<50x1xf32, #tpu.memory_space<vmem>>, vector<50x1xf32>
    %18 = vector.broadcast %17 : vector<50x1xf32> to vector<50x128xf32>
    %19 = arith.addf %16, %18 : vector<50x128xf32>
    %cst_17 = arith.constant 0.000000e+00 : f32
    %20 = vector.broadcast %cst_17 : f32 to vector<50x128xf32>
    %21 = arith.maximumf %19, %20 : vector<50x128xf32>
    %c0_18 = arith.constant 0 : index
    %c0_19 = arith.constant 0 : index
    %22 = vector.load %arg8[%c0_18, %c0_19] : memref<50x50xf32, #tpu.memory_space<vmem>>, vector<50x50xf32>
    %cst_20 = arith.constant dense<0.000000e+00> : vector<50x128xf32>
    %23 = tpu.matmul %22, %21, %cst_20 {dimension_numbers = #tpu.dot_dimension_numbers<[1], [0], [0], [1], [0, 0, 1, 1], [], []>} : vector<50x50xf32>, vector<50x128xf32>, vector<50x128xf32> -> vector<50x128xf32>
    %c0_21 = arith.constant 0 : index
    %c0_22 = arith.constant 0 : index
    %24 = vector.load %arg9[%c0_21, %c0_22] : memref<50x1xf32, #tpu.memory_space<vmem>>, vector<50x1xf32>
    %25 = vector.broadcast %24 : vector<50x1xf32> to vector<50x128xf32>
    %26 = arith.addf %23, %25 : vector<50x128xf32>
    %cst_23 = arith.constant 0.000000e+00 : f32
    %27 = vector.broadcast %cst_23 : f32 to vector<50x128xf32>
    %28 = arith.maximumf %26, %27 : vector<50x128xf32>
    %c0_24 = arith.constant 0 : index
    %c0_25 = arith.constant 0 : index
    %29 = vector.load %arg10[%c0_24, %c0_25] : memref<26x50xf32, #tpu.memory_space<vmem>>, vector<26x50xf32>
    %cst_26 = arith.constant dense<0.000000e+00> : vector<26x128xf32>
    %30 = tpu.matmul %29, %28, %cst_26 {dimension_numbers = #tpu.dot_dimension_numbers<[1], [0], [0], [1], [0, 0, 1, 1], [], []>} : vector<26x50xf32>, vector<50x128xf32>, vector<26x128xf32> -> vector<26x128xf32>
    %c0_27 = arith.constant 0 : index
    %c0_28 = arith.constant 0 : index
    %31 = vector.load %arg11[%c0_27, %c0_28] : memref<26x1xf32, #tpu.memory_space<vmem>>, vector<26x1xf32>
    %32 = vector.broadcast %31 : vector<26x1xf32> to vector<26x128xf32>
    %33 = arith.addf %30, %32 : vector<26x128xf32>
    %c0_29 = arith.constant 0 : index
    %c0_30 = arith.constant 0 : index
    %34 = vector.load %arg12[%c0_29, %c0_30] : memref<26x128xf32, #tpu.memory_space<vmem>>, vector<26x128xf32>
    tpu.vector_store %arg12[%c0_29, %c0_30], %33 {strides = array<i32>} : memref<26x128xf32, #tpu.memory_space<vmem>>, vector<26x128xf32>,
    return
  }
  func.func @transform_0(%arg0: i32) -> (i32, i32) {
    %c0_i32 = arith.constant 0 : i32
    %c0_i32_0 = arith.constant 0 : i32
    return %c0_i32, %arg0 : i32, i32
  }
  func.func @transform_1(%arg0: i32) -> (i32, i32) {
    %c0_i32 = arith.constant 0 : i32
    %c0_i32_0 = arith.constant 0 : i32
    %c0_i32_1 = arith.constant 0 : i32
    return %c0_i32, %c0_i32_0 : i32, i32
  }
  func.func @transform_2(%arg0: i32) -> (i32, i32) {
    %c0_i32 = arith.constant 0 : i32
    %c0_i32_0 = arith.constant 0 : i32
    %c0_i32_1 = arith.constant 0 : i32
    return %c0_i32, %c0_i32_0 : i32, i32
  }
  func.func @transform_3(%arg0: i32) -> (i32, i32) {
    %c0_i32 = arith.constant 0 : i32
    %c0_i32_0 = arith.constant 0 : i32
    %c0_i32_1 = arith.constant 0 : i32
    return %c0_i32, %c0_i32_0 : i32, i32
  }
  func.func @transform_4(%arg0: i32) -> (i32, i32) {
    %c0_i32 = arith.constant 0 : i32
    %c0_i32_0 = arith.constant 0 : i32
    %c0_i32_1 = arith.constant 0 : i32
    return %c0_i32, %c0_i32_0 : i32, i32
  }
  func.func @transform_5(%arg0: i32) -> (i32, i32) {
    %c0_i32 = arith.constant 0 : i32
    %c0_i32_0 = arith.constant 0 : i32
    %c0_i32_1 = arith.constant 0 : i32
    return %c0_i32, %c0_i32_0 : i32, i32
  }
  func.func @transform_6(%arg0: i32) -> (i32, i32) {
    %c0_i32 = arith.constant 0 : i32
    %c0_i32_0 = arith.constant 0 : i32
    %c0_i32_1 = arith.constant 0 : i32
    return %c0_i32, %c0_i32_0 : i32, i32
  }
  func.func @transform_7(%arg0: i32) -> (i32, i32) {
    %c0_i32 = arith.constant 0 : i32
    %c0_i32_0 = arith.constant 0 : i32
    %c0_i32_1 = arith.constant 0 : i32
    return %c0_i32, %c0_i32_0 : i32, i32
  }
  func.func @transform_8(%arg0: i32) -> (i32, i32) {
    %c0_i32 = arith.constant 0 : i32
    %c0_i32_0 = arith.constant 0 : i32
    %c0_i32_1 = arith.constant 0 : i32
    return %c0_i32, %c0_i32_0 : i32, i32
  }
  func.func @transform_9(%arg0: i32) -> (i32, i32) {
    %c0_i32 = arith.constant 0 : i32
    %c0_i32_0 = arith.constant 0 : i32
    %c0_i32_1 = arith.constant 0 : i32
    return %c0_i32, %c0_i32_0 : i32, i32
  }
  func.func @transform_10(%arg0: i32) -> (i32, i32) {
    %c0_i32 = arith.constant 0 : i32
    %c0_i32_0 = arith.constant 0 : i32
    %c0_i32_1 = arith.constant 0 : i32
    return %c0_i32, %c0_i32_0 : i32, i32
  }
  func.func @transform_11(%arg0: i32) -> (i32, i32) {
    %c0_i32 = arith.constant 0 : i32
    %c0_i32_0 = arith.constant 0 : i32
    return %c0_i32, %arg0 : i32, i32
  }
}

</mosaic_0001>

<llo_original>
// kernel: mymodel_forward.1
$region0: #{mymodel_forward.1}
  #allocation0 [shape = 'u32[]', space=smem, size = 0x4, offset = 0x4, fixed_abs, tag = 'smem constant byte address 0x4 - core index']
  #allocation1 [shape = 'u32[144,128]{1,0:T(1,128)}', space=vmem, size = 0x12000, scoped, tag = 'internal scratch']
  %s0 = inlined_call_operand.vmem [shape: f32[26,128], index: 0, kind: input, shape index: {}]
  %s1 = inlined_call_operand.vmem [shape: f32[50,26], index: 1, kind: input, shape index: {}]
  %s2 = inlined_call_operand.vmem [shape: f32[50,1], index: 2, kind: input, shape index: {}]
  %s3 = inlined_call_operand.vmem [shape: f32[50,50], index: 3, kind: input, shape index: {}]
  %s4 = inlined_call_operand.vmem [shape: f32[50,1], index: 4, kind: input, shape index: {}]
  %s5 = inlined_call_operand.vmem [shape: f32[50,50], index: 5, kind: input, shape index: {}]
  %s6 = inlined_call_operand.vmem [shape: f32[50,1], index: 6, kind: input, shape index: {}]
  %s7 = inlined_call_operand.vmem [shape: f32[50,50], index: 7, kind: input, shape index: {}]
  %s8 = inlined_call_operand.vmem [shape: f32[50,1], index: 8, kind: input, shape index: {}]
  %s9 = inlined_call_operand.vmem [shape: f32[26,50], index: 9, kind: input, shape index: {}]
  %s10 = inlined_call_operand.vmem [shape: f32[26,1], index: 10, kind: input, shape index: {}]
  %s11 = inlined_call_operand.vmem [shape: f32[26,128], index: 11, kind: output, shape index: {}]
  %s12 = sld [smem:[#allocation0]]
  $region54: #{mymodel_forward.1} parent=0
    _
  %s14 = ssub.s32 1, %s12
  %s15 = scalar_select 0, %s14, %s12
  // Predicated region
  $region2: #{mymodel_forward.1} parent=0 // pred_check
    _
  $region3: #{mymodel_forward.1} parent=0 // pred_check_branch
    %17 = sbr.rel (0) target = $region5
  $region4: #{mymodel_forward.1} parent=0 // pred_region
    _
  $region5: #{mymodel_forward.1} parent=0 // pred_fallthru
    _
  // Predicated region
  $region6: #{mymodel_forward.1} parent=0 // pred_check
    _
  $region7: #{mymodel_forward.1} parent=0 // pred_check_branch
    %19 = sbr.rel (0) target = $region9
  $region8: #{mymodel_forward.1} parent=0 // pred_region
    _
  $region9: #{mymodel_forward.1} parent=0 // pred_fallthru
    _
  // Predicated region
  $region10: #{mymodel_forward.1} parent=0 // pred_check
    _
  $region11: #{mymodel_forward.1} parent=0 // pred_check_branch
    %21 = sbr.rel (0) target = $region13
  $region12: #{mymodel_forward.1} parent=0 // pred_region
    _
  $region13: #{mymodel_forward.1} parent=0 // pred_fallthru
    _
  // Predicated region
  $region14: #{mymodel_forward.1} parent=0 // pred_check
    _
  $region15: #{mymodel_forward.1} parent=0 // pred_check_branch
    %23 = sbr.rel (0) target = $region17
  $region16: #{mymodel_forward.1} parent=0 // pred_region
    _
  $region17: #{mymodel_forward.1} parent=0 // pred_fallthru
    _
  // Predicated region
  $region18: #{mymodel_forward.1} parent=0 // pred_check
    _
  $region19: #{mymodel_forward.1} parent=0 // pred_check_branch
    %25 = sbr.rel (0) target = $region21
  $region20: #{mymodel_forward.1} parent=0 // pred_region
    _
  $region21: #{mymodel_forward.1} parent=0 // pred_fallthru
    _
  // Predicated region
  $region22: #{mymodel_forward.1} parent=0 // pred_check
    _
  $region23: #{mymodel_forward.1} parent=0 // pred_check_branch
    %27 = sbr.rel (0) target = $region25
  $region24: #{mymodel_forward.1} parent=0 // pred_region
    _
  $region25: #{mymodel_forward.1} parent=0 // pred_fallthru
    _
  // Predicated region
  $region26: #{mymodel_forward.1} parent=0 // pred_check
    _
  $region27: #{mymodel_forward.1} parent=0 // pred_check_branch
    %29 = sbr.rel (0) target = $region29
  $region28: #{mymodel_forward.1} parent=0 // pred_region
    _
  $region29: #{mymodel_forward.1} parent=0 // pred_fallthru
    _
  // Predicated region
  $region30: #{mymodel_forward.1} parent=0 // pred_check
    _
  $region31: #{mymodel_forward.1} parent=0 // pred_check_branch
    %31 = sbr.rel (0) target = $region33
  $region32: #{mymodel_forward.1} parent=0 // pred_region
    _
  $region33: #{mymodel_forward.1} parent=0 // pred_fallthru
    _
  // Predicated region
  $region34: #{mymodel_forward.1} parent=0 // pred_check
    _
  $region35: #{mymodel_forward.1} parent=0 // pred_check_branch
    %33 = sbr.rel (0) target = $region37
  $region36: #{mymodel_forward.1} parent=0 // pred_region
    _
  $region37: #{mymodel_forward.1} parent=0 // pred_fallthru
    _
  // Predicated region
  $region38: #{mymodel_forward.1} parent=0 // pred_check
    _
  $region39: #{mymodel_forward.1} parent=0 // pred_check_branch
    %35 = sbr.rel (0) target = $region41
  $region40: #{mymodel_forward.1} parent=0 // pred_region
    _
  $region41: #{mymodel_forward.1} parent=0 // pred_fallthru
    _
  // Predicated region
  $region42: #{mymodel_forward.1} parent=0 // pred_check
    _
  $region43: #{mymodel_forward.1} parent=0 // pred_check_branch
    %37 = sbr.rel (0) target = $region45
  $region44: #{mymodel_forward.1} parent=0 // pred_region
    _
  $region45: #{mymodel_forward.1} parent=0 // pred_fallthru
    _
  %v38 = vld [vmem:[%s0] sm:$0xff]
  %v39 = vld [vmem:[%s0 + $0x8] sm:$0xff]
  %v40 = vld [vmem:[%s0 + $0x10] sm:$0xff]
  %v41 = vld [vmem:[%s0 + $0x18] sm:$0x3]
  %v42 = vld [vmem:[%s1] sm:$0xff]
  %v43 = vld [vmem:[%s1 + $0x8] sm:$0xff]
  %v44 = vld [vmem:[%s1 + $0x10] sm:$0xff]
  %v45 = vld [vmem:[%s1 + $0x18] sm:$0xff]
  %v46 = vld [vmem:[%s1 + $0x20] sm:$0xff]
  %v47 = vld [vmem:[%s1 + $0x28] sm:$0xff]
  %v48 = vld [vmem:[%s1 + $0x30] sm:$0x3]
  %v49 = vld [vmem:[%s2] sm:$0xff]
  %v50 = vld [vmem:[%s2 + $0x8] sm:$0xff]
  %v51 = vld [vmem:[%s2 + $0x10] sm:$0xff]
  %v52 = vld [vmem:[%s2 + $0x18] sm:$0xff]
  %v53 = vld [vmem:[%s2 + $0x20] sm:$0xff]
  %v54 = vld [vmem:[%s2 + $0x28] sm:$0xff]
  %v55 = vld [vmem:[%s2 + $0x30] sm:$0x3]
  %57 = vset.pattern.permute.xlu0 0
  %58 = vperm.xlu0 %57, %v49
  %v59 = vpop.permute.xlu0 %58
  %62 = vset.pattern.permute.xlu0 0
  %63 = vperm.xlu0 %62, %v50
  %v64 = vpop.permute.xlu0 %63
  %67 = vset.pattern.permute.xlu0 0
  %68 = vperm.xlu0 %67, %v51
  %v69 = vpop.permute.xlu0 %68
  %72 = vset.pattern.permute.xlu0 0
  %73 = vperm.xlu0 %72, %v52
  %v74 = vpop.permute.xlu0 %73
  %77 = vset.pattern.permute.xlu0 0
  %78 = vperm.xlu0 %77, %v53
  %v79 = vpop.permute.xlu0 %78
  %82 = vset.pattern.permute.xlu0 0
  %83 = vperm.xlu0 %82, %v54
  %v84 = vpop.permute.xlu0 %83
  %87 = vset.pattern.permute.xlu0 0
  %88 = vperm.xlu0 %87, %v55
  %v89 = vpop.permute.xlu0 %88
  %vm91 = vcmask 211968
  %v93 = vsel %vm91, %v42, 0
  %v96 = vsel %vm91, %v43, 0
  %v99 = vsel %vm91, %v44, 0
  %v102 = vsel %vm91, %v45, 0
  %v105 = vsel %vm91, %v46, 0
  %v108 = vsel %vm91, %v47, 0
  %v111 = vsel %vm91, %v48, 0
  %vm113 = vcmask 1041408
  %v115 = vsel %vm113, %v41, 0
  %117 = vmatprep.subr.mxu0 0.0
  %118 = vmatpush1.msra.mxu0 0.0
  %119 = vmatprep.subr.mxu0 0.0
  %120 = vmatpush1.msra.mxu0 0.0
  %121 = vmatprep.subr.mxu0 0.0
  %122 = vmatpush1.msra.mxu0 0.0
  %123 = vmatprep.subr.mxu0 0.0
  %124 = vmatpush1.msra.mxu0 0.0
  %125 = vmatprep.subr.mxu0 0.0
  %126 = vmatpush1.msra.mxu0 0.0
  %127 = vmatprep.subr.mxu0 0.0
  %128 = vmatpush1.msra.mxu0 0.0
  %129 = vmatprep.subr.mxu0 0.0
  %130 = vmatpush1.msra.mxu0 0.0
  %131 = vmatprep.subr.mxu0 0.0
  %132 = vmatpush1.msra.mxu0 0.0
  %133 = vmatprep.subr.mxu0 0.0
  %134 = vmatpush1.msra.mxu0 0.0
  %135 = vmatprep.subr.mxu0 0.0
  %136 = vmatpush1.msra.mxu0 0.0
  %137 = vmatprep.subr.mxu0 0.0
  %138 = vmatpush1.msra.mxu0 0.0
  %139 = vmatprep.subr.mxu0 0.0
  %140 = vmatpush1.msra.mxu0 0.0
  %141 = vmatprep.subr.mxu0 0.0
  %142 = vmatpush1.msra.mxu0 %v115
  %143 = vmatprep.subr.mxu0 0.0
  %144 = vmatpush1.msra.mxu0 %v40
  %145 = vmatprep.subr.mxu0 0.0
  %146 = vmatpush1.msra.mxu0 %v39
  %147 = vmatprep.subr.mxu0 0.0
  %148 = vmatpush1.msra.mxu0 %v38
  %149 = vmatprep.subr.mxu0 0.0
  %150 = vmatpush2.msra.mxu0 0.0
  %151 = vmatprep.subr.mxu0 0.0
  %152 = vmatpush2.msra.mxu0 0.0
  %153 = vmatprep.subr.mxu0 0.0
  %154 = vmatpush2.msra.mxu0 0.0
  %155 = vmatprep.subr.mxu0 0.0
  %156 = vmatpush2.msra.mxu0 0.0
  %157 = vmatprep.subr.mxu0 0.0
  %158 = vmatpush2.msra.mxu0 0.0
  %159 = vmatprep.subr.mxu0 0.0
  %160 = vmatpush2.msra.mxu0 0.0
  %161 = vmatprep.subr.mxu0 0.0
  %162 = vmatpush2.msra.mxu0 0.0
  %163 = vmatprep.subr.mxu0 0.0
  %164 = vmatpush2.msra.mxu0 0.0
  %165 = vmatprep.subr.mxu0 0.0
  %166 = vmatpush2.msra.mxu0 0.0
  %167 = vmatprep.subr.mxu0 0.0
  %168 = vmatpush2.msra.mxu0 0.0
  %169 = vmatprep.subr.mxu0 0.0
  %170 = vmatpush2.msra.mxu0 0.0
  %171 = vmatprep.subr.mxu0 0.0
  %172 = vmatpush2.msra.mxu0 0.0
  %173 = vmatprep.subr.mxu0 0.0
  %174 = vmatpush2.msra.mxu0 0.0
  %175 = vmatprep.subr.mxu0 0.0
  %176 = vmatpush2.msra.mxu0 0.0
  %177 = vmatprep.subr.mxu0 0.0
  %178 = vmatpush2.msra.mxu0 0.0
  %179 = vmatprep.subr.mxu0 0.0
  %180 = vmatpush2.msra.mxu0 0.0
  %181 = vmatprep.mubr.f32.mxu0 0.0
  %182 = vmatmul.mubr.f32.gmra.mxu0 %v93
  %v183 = vpop.f32.mrf.mxu0
  %v184 = vadd.f32 %v59, %v183
  %v185 = vpop.f32.mrf.mxu0
  %186 = vmatprep.mubr.f32.mxu0 0.0
  %187 = vmatmul.mubr.f32.gmra.mxu0 %v96
  %v188 = vpop.f32.mrf.mxu0
  %v189 = vadd.f32 %v64, %v188
  %v190 = vpop.f32.mrf.mxu0
  %191 = vmatprep.mubr.f32.mxu0 0.0
  %192 = vmatmul.mubr.f32.gmra.mxu0 %v99
  %v193 = vpop.f32.mrf.mxu0
  %v194 = vadd.f32 %v69, %v193
  %v195 = vpop.f32.mrf.mxu0
  %196 = vmatprep.mubr.f32.mxu0 0.0
  %197 = vmatmul.mubr.f32.gmra.mxu0 %v102
  %v198 = vpop.f32.mrf.mxu0
  %v199 = vadd.f32 %v74, %v198
  %v200 = vpop.f32.mrf.mxu0
  %201 = vmatprep.mubr.f32.mxu0 0.0
  %202 = vmatmul.mubr.f32.gmra.mxu0 %v105
  %v203 = vpop.f32.mrf.mxu0
  %v204 = vadd.f32 %v79, %v203
  %v205 = vpop.f32.mrf.mxu0
  %206 = vmatprep.mubr.f32.mxu0 0.0
  %207 = vmatmul.mubr.f32.gmra.mxu0 %v108
  %v208 = vpop.f32.mrf.mxu0
  %v209 = vadd.f32 %v84, %v208
  %v210 = vpop.f32.mrf.mxu0
  %211 = vmatprep.mubr.f32.mxu0 0.0
  %212 = vmatmul.mubr.f32.gmra.mxu0 %v111
  %v213 = vpop.f32.mrf.mxu0
  %v214 = vadd.f32 %v89, %v213
  %v215 = vpop.f32.mrf.mxu0
  %216 = vdwg.mxu0
  %v217 = vmax.f32 %v184, 0.0
  %v218 = vmax.f32 %v189, 0.0
  %v219 = vmax.f32 %v194, 0.0
  %v220 = vmax.f32 %v199, 0.0
  %v221 = vmax.f32 %v204, 0.0
  %v222 = vmax.f32 %v209, 0.0
  %v223 = vmax.f32 %v214, 0.0
  %v224 = vld [vmem:[%s3] sm:$0xff]
  %v225 = vld [vmem:[%s3 + $0x8] sm:$0xff]
  %v226 = vld [vmem:[%s3 + $0x10] sm:$0xff]
  %v227 = vld [vmem:[%s3 + $0x18] sm:$0xff]
  %v228 = vld [vmem:[%s3 + $0x20] sm:$0xff]
  %v229 = vld [vmem:[%s3 + $0x28] sm:$0xff]
  %v230 = vld [vmem:[%s3 + $0x30] sm:$0x3]
  %v231 = vld [vmem:[%s4] sm:$0xff]
  %v232 = vld [vmem:[%s4 + $0x8] sm:$0xff]
  %v233 = vld [vmem:[%s4 + $0x10] sm:$0xff]
  %v234 = vld [vmem:[%s4 + $0x18] sm:$0xff]
  %v235 = vld [vmem:[%s4 + $0x20] sm:$0xff]
  %v236 = vld [vmem:[%s4 + $0x28] sm:$0xff]
  %v237 = vld [vmem:[%s4 + $0x30] sm:$0x3]
  %239 = vset.pattern.permute.xlu0 0
  %240 = vperm.xlu0 %239, %v231
  %v241 = vpop.permute.xlu0 %240
  %244 = vset.pattern.permute.xlu0 0
  %245 = vperm.xlu0 %244, %v232
  %v246 = vpop.permute.xlu0 %245
  %249 = vset.pattern.permute.xlu0 0
  %250 = vperm.xlu0 %249, %v233
  %v251 = vpop.permute.xlu0 %250
  %254 = vset.pattern.permute.xlu0 0
  %255 = vperm.xlu0 %254, %v234
  %v256 = vpop.permute.xlu0 %255
  %259 = vset.pattern.permute.xlu0 0
  %260 = vperm.xlu0 %259, %v235
  %v261 = vpop.permute.xlu0 %260
  %264 = vset.pattern.permute.xlu0 0
  %265 = vperm.xlu0 %264, %v236
  %v266 = vpop.permute.xlu0 %265
  %269 = vset.pattern.permute.xlu0 0
  %270 = vperm.xlu0 %269, %v237
  %v271 = vpop.permute.xlu0 %270
  %vm273 = vcmask 408576
  %v275 = vsel %vm273, %v224, 0
  %v278 = vsel %vm273, %v225, 0
  %v281 = vsel %vm273, %v226, 0
  %v284 = vsel %vm273, %v227, 0
  %v287 = vsel %vm273, %v228, 0
  %v290 = vsel %vm273, %v229, 0
  %v293 = vsel %vm273, %v230, 0
  %v296 = vsel %vm113, %v223, 0
  %298 = vmatprep.subr.mxu0 0.0
  %299 = vmatpush1.msra.mxu0 0.0
  %300 = vmatprep.subr.mxu0 0.0
  %301 = vmatpush1.msra.mxu0 0.0
  %302 = vmatprep.subr.mxu0 0.0
  %303 = vmatpush1.msra.mxu0 0.0
  %304 = vmatprep.subr.mxu0 0.0
  %305 = vmatpush1.msra.mxu0 0.0
  %306 = vmatprep.subr.mxu0 0.0
  %307 = vmatpush1.msra.mxu0 0.0
  %308 = vmatprep.subr.mxu0 0.0
  %309 = vmatpush1.msra.mxu0 0.0
  %310 = vmatprep.subr.mxu0 0.0
  %311 = vmatpush1.msra.mxu0 0.0
  %312 = vmatprep.subr.mxu0 0.0
  %313 = vmatpush1.msra.mxu0 0.0
  %314 = vmatprep.subr.mxu0 0.0
  %315 = vmatpush1.msra.mxu0 0.0
  %316 = vmatprep.subr.mxu0 0.0
  %317 = vmatpush1.msra.mxu0 %v296
  %318 = vmatprep.subr.mxu0 0.0
  %319 = vmatpush1.msra.mxu0 %v222
  %320 = vmatprep.subr.mxu0 0.0
  %321 = vmatpush1.msra.mxu0 %v221
  %322 = vmatprep.subr.mxu0 0.0
  %323 = vmatpush1.msra.mxu0 %v220
  %324 = vmatprep.subr.mxu0 0.0
  %325 = vmatpush1.msra.mxu0 %v219
  %326 = vmatprep.subr.mxu0 0.0
  %327 = vmatpush1.msra.mxu0 %v218
  %328 = vmatprep.subr.mxu0 0.0
  %329 = vmatpush1.msra.mxu0 %v217
  %330 = vmatprep.subr.mxu0 0.0
  %331 = vmatpush2.msra.mxu0 0.0
  %332 = vmatprep.subr.mxu0 0.0
  %333 = vmatpush2.msra.mxu0 0.0
  %334 = vmatprep.subr.mxu0 0.0
  %335 = vmatpush2.msra.mxu0 0.0
  %336 = vmatprep.subr.mxu0 0.0
  %337 = vmatpush2.msra.mxu0 0.0
  %338 = vmatprep.subr.mxu0 0.0
  %339 = vmatpush2.msra.mxu0 0.0
  %340 = vmatprep.subr.mxu0 0.0
  %341 = vmatpush2.msra.mxu0 0.0
  %342 = vmatprep.subr.mxu0 0.0
  %343 = vmatpush2.msra.mxu0 0.0
  %344 = vmatprep.subr.mxu0 0.0
  %345 = vmatpush2.msra.mxu0 0.0
  %346 = vmatprep.subr.mxu0 0.0
  %347 = vmatpush2.msra.mxu0 0.0
  %348 = vmatprep.subr.mxu0 0.0
  %349 = vmatpush2.msra.mxu0 0.0
  %350 = vmatprep.subr.mxu0 0.0
  %351 = vmatpush2.msra.mxu0 0.0
  %352 = vmatprep.subr.mxu0 0.0
  %353 = vmatpush2.msra.mxu0 0.0
  %354 = vmatprep.subr.mxu0 0.0
  %355 = vmatpush2.msra.mxu0 0.0
  %356 = vmatprep.subr.mxu0 0.0
  %357 = vmatpush2.msra.mxu0 0.0
  %358 = vmatprep.subr.mxu0 0.0
  %359 = vmatpush2.msra.mxu0 0.0
  %360 = vmatprep.subr.mxu0 0.0
  %361 = vmatpush2.msra.mxu0 0.0
  %362 = vmatprep.mubr.f32.mxu0 0.0
  %363 = vmatmul.mubr.f32.gmra.mxu0 %v275
  %v364 = vpop.f32.mrf.mxu0
  %v365 = vadd.f32 %v241, %v364
  %v366 = vpop.f32.mrf.mxu0
  %367 = vmatprep.mubr.f32.mxu0 0.0
  %368 = vmatmul.mubr.f32.gmra.mxu0 %v278
  %v369 = vpop.f32.mrf.mxu0
  %v370 = vadd.f32 %v246, %v369
  %v371 = vpop.f32.mrf.mxu0
  %372 = vmatprep.mubr.f32.mxu0 0.0
  %373 = vmatmul.mubr.f32.gmra.mxu0 %v281
  %v374 = vpop.f32.mrf.mxu0
  %v375 = vadd.f32 %v251, %v374
  %v376 = vpop.f32.mrf.mxu0
  %377 = vmatprep.mubr.f32.mxu0 0.0
  %378 = vmatmul.mubr.f32.gmra.mxu0 %v284
  %v379 = vpop.f32.mrf.mxu0
  %v380 = vadd.f32 %v256, %v379
  %v381 = vpop.f32.mrf.mxu0
  %382 = vmatprep.mubr.f32.mxu0 0.0
  %383 = vmatmul.mubr.f32.gmra.mxu0 %v287
  %v384 = vpop.f32.mrf.mxu0
  %v385 = vadd.f32 %v261, %v384
  %v386 = vpop.f32.mrf.mxu0
  %387 = vmatprep.mubr.f32.mxu0 0.0
  %388 = vmatmul.mubr.f32.gmra.mxu0 %v290
  %v389 = vpop.f32.mrf.mxu0
  %v390 = vadd.f32 %v266, %v389
  %v391 = vpop.f32.mrf.mxu0
  %392 = vmatprep.mubr.f32.mxu0 0.0
  %393 = vmatmul.mubr.f32.gmra.mxu0 %v293
  %v394 = vpop.f32.mrf.mxu0
  %v395 = vadd.f32 %v271, %v394
  %v396 = vpop.f32.mrf.mxu0
  %397 = vdwg.mxu0
  %v398 = vmax.f32 %v365, 0.0
  %v399 = vmax.f32 %v370, 0.0
  %v400 = vmax.f32 %v375, 0.0
  %v401 = vmax.f32 %v380, 0.0
  %v402 = vmax.f32 %v385, 0.0
  %v403 = vmax.f32 %v390, 0.0
  %v404 = vmax.f32 %v395, 0.0
  %v405 = vld [vmem:[%s5] sm:$0xff]
  %v406 = vld [vmem:[%s5 + $0x8] sm:$0xff]
  %v407 = vld [vmem:[%s5 + $0x10] sm:$0xff]
  %v408 = vld [vmem:[%s5 + $0x18] sm:$0xff]
  %v409 = vld [vmem:[%s5 + $0x20] sm:$0xff]
  %v410 = vld [vmem:[%s5 + $0x28] sm:$0xff]
  %v411 = vld [vmem:[%s5 + $0x30] sm:$0x3]
  %v412 = vld [vmem:[%s6] sm:$0xff]
  %v413 = vld [vmem:[%s6 + $0x8] sm:$0xff]
  %v414 = vld [vmem:[%s6 + $0x10] sm:$0xff]
  %v415 = vld [vmem:[%s6 + $0x18] sm:$0xff]
  %v416 = vld [vmem:[%s6 + $0x20] sm:$0xff]
  %v417 = vld [vmem:[%s6 + $0x28] sm:$0xff]
  %v418 = vld [vmem:[%s6 + $0x30] sm:$0x3]
  %420 = vset.pattern.permute.xlu0 0
  %421 = vperm.xlu0 %420, %v412
  %v422 = vpop.permute.xlu0 %421
  %425 = vset.pattern.permute.xlu0 0
  %426 = vperm.xlu0 %425, %v413
  %v427 = vpop.permute.xlu0 %426
  %430 = vset.pattern.permute.xlu0 0
  %431 = vperm.xlu0 %430, %v414
  %v432 = vpop.permute.xlu0 %431
  %435 = vset.pattern.permute.xlu0 0
  %436 = vperm.xlu0 %435, %v415
  %v437 = vpop.permute.xlu0 %436
  %440 = vset.pattern.permute.xlu0 0
  %441 = vperm.xlu0 %440, %v416
  %v442 = vpop.permute.xlu0 %441
  %445 = vset.pattern.permute.xlu0 0
  %446 = vperm.xlu0 %445, %v417
  %v447 = vpop.permute.xlu0 %446
  %450 = vset.pattern.permute.xlu0 0
  %451 = vperm.xlu0 %450, %v418
  %v452 = vpop.permute.xlu0 %451
  %v455 = vsel %vm273, %v405, 0
  %v458 = vsel %vm273, %v406, 0
  %v461 = vsel %vm273, %v407, 0
  %v464 = vsel %vm273, %v408, 0
  %v467 = vsel %vm273, %v409, 0
  %v470 = vsel %vm273, %v410, 0
  %v473 = vsel %vm273, %v411, 0
  %v476 = vsel %vm113, %v404, 0
  %478 = vmatprep.subr.mxu0 0.0
  %479 = vmatpush1.msra.mxu0 0.0
  %480 = vmatprep.subr.mxu0 0.0
  %481 = vmatpush1.msra.mxu0 0.0
  %482 = vmatprep.subr.mxu0 0.0
  %483 = vmatpush1.msra.mxu0 0.0
  %484 = vmatprep.subr.mxu0 0.0
  %485 = vmatpush1.msra.mxu0 0.0
  %486 = vmatprep.subr.mxu0 0.0
  %487 = vmatpush1.msra.mxu0 0.0
  %488 = vmatprep.subr.mxu0 0.0
  %489 = vmatpush1.msra.mxu0 0.0
  %490 = vmatprep.subr.mxu0 0.0
  %491 = vmatpush1.msra.mxu0 0.0
  %492 = vmatprep.subr.mxu0 0.0
  %493 = vmatpush1.msra.mxu0 0.0
  %494 = vmatprep.subr.mxu0 0.0
  %495 = vmatpush1.msra.mxu0 0.0
  %496 = vmatprep.subr.mxu0 0.0
  %497 = vmatpush1.msra.mxu0 %v476
  %498 = vmatprep.subr.mxu0 0.0
  %499 = vmatpush1.msra.mxu0 %v403
  %500 = vmatprep.subr.mxu0 0.0
  %501 = vmatpush1.msra.mxu0 %v402
  %502 = vmatprep.subr.mxu0 0.0
  %503 = vmatpush1.msra.mxu0 %v401
  %504 = vmatprep.subr.mxu0 0.0
  %505 = vmatpush1.msra.mxu0 %v400
  %506 = vmatprep.subr.mxu0 0.0
  %507 = vmatpush1.msra.mxu0 %v399
  %508 = vmatprep.subr.mxu0 0.0
  %509 = vmatpush1.msra.mxu0 %v398
  %510 = vmatprep.subr.mxu0 0.0
  %511 = vmatpush2.msra.mxu0 0.0
  %512 = vmatprep.subr.mxu0 0.0
  %513 = vmatpush2.msra.mxu0 0.0
  %514 = vmatprep.subr.mxu0 0.0
  %515 = vmatpush2.msra.mxu0 0.0
  %516 = vmatprep.subr.mxu0 0.0
  %517 = vmatpush2.msra.mxu0 0.0
  %518 = vmatprep.subr.mxu0 0.0
  %519 = vmatpush2.msra.mxu0 0.0
  %520 = vmatprep.subr.mxu0 0.0
  %521 = vmatpush2.msra.mxu0 0.0
  %522 = vmatprep.subr.mxu0 0.0
  %523 = vmatpush2.msra.mxu0 0.0
  %524 = vmatprep.subr.mxu0 0.0
  %525 = vmatpush2.msra.mxu0 0.0
  %526 = vmatprep.subr.mxu0 0.0
  %527 = vmatpush2.msra.mxu0 0.0
  %528 = vmatprep.subr.mxu0 0.0
  %529 = vmatpush2.msra.mxu0 0.0
  %530 = vmatprep.subr.mxu0 0.0
  %531 = vmatpush2.msra.mxu0 0.0
  %532 = vmatprep.subr.mxu0 0.0
  %533 = vmatpush2.msra.mxu0 0.0
  %534 = vmatprep.subr.mxu0 0.0
  %535 = vmatpush2.msra.mxu0 0.0
  %536 = vmatprep.subr.mxu0 0.0
  %537 = vmatpush2.msra.mxu0 0.0
  %538 = vmatprep.subr.mxu0 0.0
  %539 = vmatpush2.msra.mxu0 0.0
  %540 = vmatprep.subr.mxu0 0.0
  %541 = vmatpush2.msra.mxu0 0.0
  %542 = vmatprep.mubr.f32.mxu0 0.0
  %543 = vmatmul.mubr.f32.gmra.mxu0 %v455
  %v544 = vpop.f32.mrf.mxu0
  %v545 = vadd.f32 %v422, %v544
  %v546 = vpop.f32.mrf.mxu0
  %547 = vmatprep.mubr.f32.mxu0 0.0
  %548 = vmatmul.mubr.f32.gmra.mxu0 %v458
  %v549 = vpop.f32.mrf.mxu0
  %v550 = vadd.f32 %v427, %v549
  %v551 = vpop.f32.mrf.mxu0
  %552 = vmatprep.mubr.f32.mxu0 0.0
  %553 = vmatmul.mubr.f32.gmra.mxu0 %v461
  %v554 = vpop.f32.mrf.mxu0
  %v555 = vadd.f32 %v432, %v554
  %v556 = vpop.f32.mrf.mxu0
  %557 = vmatprep.mubr.f32.mxu0 0.0
  %558 = vmatmul.mubr.f32.gmra.mxu0 %v464
  %v559 = vpop.f32.mrf.mxu0
  %v560 = vadd.f32 %v437, %v559
  %v561 = vpop.f32.mrf.mxu0
  %562 = vmatprep.mubr.f32.mxu0 0.0
  %563 = vmatmul.mubr.f32.gmra.mxu0 %v467
  %v564 = vpop.f32.mrf.mxu0
  %v565 = vadd.f32 %v442, %v564
  %v566 = vpop.f32.mrf.mxu0
  %567 = vmatprep.mubr.f32.mxu0 0.0
  %568 = vmatmul.mubr.f32.gmra.mxu0 %v470
  %v569 = vpop.f32.mrf.mxu0
  %v570 = vadd.f32 %v447, %v569
  %v571 = vpop.f32.mrf.mxu0
  %572 = vmatprep.mubr.f32.mxu0 0.0
  %573 = vmatmul.mubr.f32.gmra.mxu0 %v473
  %v574 = vpop.f32.mrf.mxu0
  %v575 = vadd.f32 %v452, %v574
  %v576 = vpop.f32.mrf.mxu0
  %577 = vdwg.mxu0
  %v578 = vmax.f32 %v545, 0.0
  %v579 = vmax.f32 %v550, 0.0
  %v580 = vmax.f32 %v555, 0.0
  %v581 = vmax.f32 %v560, 0.0
  %v582 = vmax.f32 %v565, 0.0
  %v583 = vmax.f32 %v570, 0.0
  %v584 = vmax.f32 %v575, 0.0
  %v585 = vld [vmem:[%s7] sm:$0xff]
  %v586 = vld [vmem:[%s7 + $0x8] sm:$0xff]
  %v587 = vld [vmem:[%s7 + $0x10] sm:$0xff]
  %v588 = vld [vmem:[%s7 + $0x18] sm:$0xff]
  %v589 = vld [vmem:[%s7 + $0x20] sm:$0xff]
  %v590 = vld [vmem:[%s7 + $0x28] sm:$0xff]
  %v591 = vld [vmem:[%s7 + $0x30] sm:$0x3]
  %v592 = vld [vmem:[%s8] sm:$0xff]
  %v593 = vld [vmem:[%s8 + $0x8] sm:$0xff]
  %v594 = vld [vmem:[%s8 + $0x10] sm:$0xff]
  %v595 = vld [vmem:[%s8 + $0x18] sm:$0xff]
  %v596 = vld [vmem:[%s8 + $0x20] sm:$0xff]
  %v597 = vld [vmem:[%s8 + $0x28] sm:$0xff]
  %v598 = vld [vmem:[%s8 + $0x30] sm:$0x3]
  %600 = vset.pattern.permute.xlu0 0
  %601 = vperm.xlu0 %600, %v592
  %v602 = vpop.permute.xlu0 %601
  %605 = vset.pattern.permute.xlu0 0
  %606 = vperm.xlu0 %605, %v593
  %v607 = vpop.permute.xlu0 %606
  %610 = vset.pattern.permute.xlu0 0
  %611 = vperm.xlu0 %610, %v594
  %v612 = vpop.permute.xlu0 %611
  %615 = vset.pattern.permute.xlu0 0
  %616 = vperm.xlu0 %615, %v595
  %v617 = vpop.permute.xlu0 %616
  %620 = vset.pattern.permute.xlu0 0
  %621 = vperm.xlu0 %620, %v596
  %v622 = vpop.permute.xlu0 %621
  %625 = vset.pattern.permute.xlu0 0
  %626 = vperm.xlu0 %625, %v597
  %v627 = vpop.permute.xlu0 %626
  %630 = vset.pattern.permute.xlu0 0
  %631 = vperm.xlu0 %630, %v598
  %v632 = vpop.permute.xlu0 %631
  %v635 = vsel %vm273, %v585, 0
  %v638 = vsel %vm273, %v586, 0
  %v641 = vsel %vm273, %v587, 0
  %v644 = vsel %vm273, %v588, 0
  %v647 = vsel %vm273, %v589, 0
  %v650 = vsel %vm273, %v590, 0
  %v653 = vsel %vm273, %v591, 0
  %v656 = vsel %vm113, %v584, 0
  %658 = vmatprep.subr.mxu0 0.0
  %659 = vmatpush1.msra.mxu0 0.0
  %660 = vmatprep.subr.mxu0 0.0
  %661 = vmatpush1.msra.mxu0 0.0
  %662 = vmatprep.subr.mxu0 0.0
  %663 = vmatpush1.msra.mxu0 0.0
  %664 = vmatprep.subr.mxu0 0.0
  %665 = vmatpush1.msra.mxu0 0.0
  %666 = vmatprep.subr.mxu0 0.0
  %667 = vmatpush1.msra.mxu0 0.0
  %668 = vmatprep.subr.mxu0 0.0
  %669 = vmatpush1.msra.mxu0 0.0
  %670 = vmatprep.subr.mxu0 0.0
  %671 = vmatpush1.msra.mxu0 0.0
  %672 = vmatprep.subr.mxu0 0.0
  %673 = vmatpush1.msra.mxu0 0.0
  %674 = vmatprep.subr.mxu0 0.0
  %675 = vmatpush1.msra.mxu0 0.0
  %676 = vmatprep.subr.mxu0 0.0
  %677 = vmatpush1.msra.mxu0 %v656
  %678 = vmatprep.subr.mxu0 0.0
  %679 = vmatpush1.msra.mxu0 %v583
  %680 = vmatprep.subr.mxu0 0.0
  %681 = vmatpush1.msra.mxu0 %v582
  %682 = vmatprep.subr.mxu0 0.0
  %683 = vmatpush1.msra.mxu0 %v581
  %684 = vmatprep.subr.mxu0 0.0
  %685 = vmatpush1.msra.mxu0 %v580
  %686 = vmatprep.subr.mxu0 0.0
  %687 = vmatpush1.msra.mxu0 %v579
  %688 = vmatprep.subr.mxu0 0.0
  %689 = vmatpush1.msra.mxu0 %v578
  %690 = vmatprep.subr.mxu0 0.0
  %691 = vmatpush2.msra.mxu0 0.0
  %692 = vmatprep.subr.mxu0 0.0
  %693 = vmatpush2.msra.mxu0 0.0
  %694 = vmatprep.subr.mxu0 0.0
  %695 = vmatpush2.msra.mxu0 0.0
  %696 = vmatprep.subr.mxu0 0.0
  %697 = vmatpush2.msra.mxu0 0.0
  %698 = vmatprep.subr.mxu0 0.0
  %699 = vmatpush2.msra.mxu0 0.0
  %700 = vmatprep.subr.mxu0 0.0
  %701 = vmatpush2.msra.mxu0 0.0
  %702 = vmatprep.subr.mxu0 0.0
  %703 = vmatpush2.msra.mxu0 0.0
  %704 = vmatprep.subr.mxu0 0.0
  %705 = vmatpush2.msra.mxu0 0.0
  %706 = vmatprep.subr.mxu0 0.0
  %707 = vmatpush2.msra.mxu0 0.0
  %708 = vmatprep.subr.mxu0 0.0
  %709 = vmatpush2.msra.mxu0 0.0
  %710 = vmatprep.subr.mxu0 0.0
  %711 = vmatpush2.msra.mxu0 0.0
  %712 = vmatprep.subr.mxu0 0.0
  %713 = vmatpush2.msra.mxu0 0.0
  %714 = vmatprep.subr.mxu0 0.0
  %715 = vmatpush2.msra.mxu0 0.0
  %716 = vmatprep.subr.mxu0 0.0
  %717 = vmatpush2.msra.mxu0 0.0
  %718 = vmatprep.subr.mxu0 0.0
  %719 = vmatpush2.msra.mxu0 0.0
  %720 = vmatprep.subr.mxu0 0.0
  %721 = vmatpush2.msra.mxu0 0.0
  %722 = vmatprep.mubr.f32.mxu0 0.0
  %723 = vmatmul.mubr.f32.gmra.mxu0 %v635
  %v724 = vpop.f32.mrf.mxu0
  %v725 = vadd.f32 %v602, %v724
  %v726 = vpop.f32.mrf.mxu0
  %727 = vmatprep.mubr.f32.mxu0 0.0
  %728 = vmatmul.mubr.f32.gmra.mxu0 %v638
  %v729 = vpop.f32.mrf.mxu0
  %v730 = vadd.f32 %v607, %v729
  %v731 = vpop.f32.mrf.mxu0
  %732 = vmatprep.mubr.f32.mxu0 0.0
  %733 = vmatmul.mubr.f32.gmra.mxu0 %v641
  %v734 = vpop.f32.mrf.mxu0
  %v735 = vadd.f32 %v612, %v734
  %v736 = vpop.f32.mrf.mxu0
  %737 = vmatprep.mubr.f32.mxu0 0.0
  %738 = vmatmul.mubr.f32.gmra.mxu0 %v644
  %v739 = vpop.f32.mrf.mxu0
  %v740 = vadd.f32 %v617, %v739
  %v741 = vpop.f32.mrf.mxu0
  %742 = vmatprep.mubr.f32.mxu0 0.0
  %743 = vmatmul.mubr.f32.gmra.mxu0 %v647
  %v744 = vpop.f32.mrf.mxu0
  %v745 = vadd.f32 %v622, %v744
  %v746 = vpop.f32.mrf.mxu0
  %747 = vmatprep.mubr.f32.mxu0 0.0
  %748 = vmatmul.mubr.f32.gmra.mxu0 %v650
  %v749 = vpop.f32.mrf.mxu0
  %v750 = vadd.f32 %v627, %v749
  %v751 = vpop.f32.mrf.mxu0
  %752 = vmatprep.mubr.f32.mxu0 0.0
  %753 = vmatmul.mubr.f32.gmra.mxu0 %v653
  %v754 = vpop.f32.mrf.mxu0
  %v755 = vadd.f32 %v632, %v754
  %v756 = vpop.f32.mrf.mxu0
  %757 = vdwg.mxu0
  %v758 = vmax.f32 %v725, 0.0
  %v759 = vmax.f32 %v730, 0.0
  %v760 = vmax.f32 %v735, 0.0
  %v761 = vmax.f32 %v740, 0.0
  %v762 = vmax.f32 %v745, 0.0
  %v763 = vmax.f32 %v750, 0.0
  %v764 = vmax.f32 %v755, 0.0
  %v765 = vld [vmem:[%s9] sm:$0xff]
  %v766 = vld [vmem:[%s9 + $0x8] sm:$0xff]
  %v767 = vld [vmem:[%s9 + $0x10] sm:$0xff]
  %v768 = vld [vmem:[%s9 + $0x18] sm:$0x3]
  %v769 = vld [vmem:[%s10] sm:$0xff]
  %v770 = vld [vmem:[%s10 + $0x8] sm:$0xff]
  %v771 = vld [vmem:[%s10 + $0x10] sm:$0xff]
  %v772 = vld [vmem:[%s10 + $0x18] sm:$0x3]
  %774 = vset.pattern.permute.xlu0 0
  %775 = vperm.xlu0 %774, %v769
  %v776 = vpop.permute.xlu0 %775
  %779 = vset.pattern.permute.xlu0 0
  %780 = vperm.xlu0 %779, %v770
  %v781 = vpop.permute.xlu0 %780
  %784 = vset.pattern.permute.xlu0 0
  %785 = vperm.xlu0 %784, %v771
  %v786 = vpop.permute.xlu0 %785
  %789 = vset.pattern.permute.xlu0 0
  %790 = vperm.xlu0 %789, %v772
  %v791 = vpop.permute.xlu0 %790
  %v794 = vsel %vm273, %v765, 0
  %v797 = vsel %vm273, %v766, 0
  %v800 = vsel %vm273, %v767, 0
  %v803 = vsel %vm273, %v768, 0
  %v806 = vsel %vm113, %v764, 0
  %808 = vmatprep.subr.mxu0 0.0
  %809 = vmatpush1.msra.mxu0 0.0
  %810 = vmatprep.subr.mxu0 0.0
  %811 = vmatpush1.msra.mxu0 0.0
  %812 = vmatprep.subr.mxu0 0.0
  %813 = vmatpush1.msra.mxu0 0.0
  %814 = vmatprep.subr.mxu0 0.0
  %815 = vmatpush1.msra.mxu0 0.0
  %816 = vmatprep.subr.mxu0 0.0
  %817 = vmatpush1.msra.mxu0 0.0
  %818 = vmatprep.subr.mxu0 0.0
  %819 = vmatpush1.msra.mxu0 0.0
  %820 = vmatprep.subr.mxu0 0.0
  %821 = vmatpush1.msra.mxu0 0.0
  %822 = vmatprep.subr.mxu0 0.0
  %823 = vmatpush1.msra.mxu0 0.0
  %824 = vmatprep.subr.mxu0 0.0
  %825 = vmatpush1.msra.mxu0 0.0
  %826 = vmatprep.subr.mxu0 0.0
  %827 = vmatpush1.msra.mxu0 %v806
  %828 = vmatprep.subr.mxu0 0.0
  %829 = vmatpush1.msra.mxu0 %v763
  %830 = vmatprep.subr.mxu0 0.0
  %831 = vmatpush1.msra.mxu0 %v762
  %832 = vmatprep.subr.mxu0 0.0
  %833 = vmatpush1.msra.mxu0 %v761
  %834 = vmatprep.subr.mxu0 0.0
  %835 = vmatpush1.msra.mxu0 %v760
  %836 = vmatprep.subr.mxu0 0.0
  %837 = vmatpush1.msra.mxu0 %v759
  %838 = vmatprep.subr.mxu0 0.0
  %839 = vmatpush1.msra.mxu0 %v758
  %840 = vmatprep.subr.mxu0 0.0
  %841 = vmatpush2.msra.mxu0 0.0
  %842 = vmatprep.subr.mxu0 0.0
  %843 = vmatpush2.msra.mxu0 0.0
  %844 = vmatprep.subr.mxu0 0.0
  %845 = vmatpush2.msra.mxu0 0.0
  %846 = vmatprep.subr.mxu0 0.0
  %847 = vmatpush2.msra.mxu0 0.0
  %848 = vmatprep.subr.mxu0 0.0
  %849 = vmatpush2.msra.mxu0 0.0
  %850 = vmatprep.subr.mxu0 0.0
  %851 = vmatpush2.msra.mxu0 0.0
  %852 = vmatprep.subr.mxu0 0.0
  %853 = vmatpush2.msra.mxu0 0.0
  %854 = vmatprep.subr.mxu0 0.0
  %855 = vmatpush2.msra.mxu0 0.0
  %856 = vmatprep.subr.mxu0 0.0
  %857 = vmatpush2.msra.mxu0 0.0
  %858 = vmatprep.subr.mxu0 0.0
  %859 = vmatpush2.msra.mxu0 0.0
  %860 = vmatprep.subr.mxu0 0.0
  %861 = vmatpush2.msra.mxu0 0.0
  %862 = vmatprep.subr.mxu0 0.0
  %863 = vmatpush2.msra.mxu0 0.0
  %864 = vmatprep.subr.mxu0 0.0
  %865 = vmatpush2.msra.mxu0 0.0
  %866 = vmatprep.subr.mxu0 0.0
  %867 = vmatpush2.msra.mxu0 0.0
  %868 = vmatprep.subr.mxu0 0.0
  %869 = vmatpush2.msra.mxu0 0.0
  %870 = vmatprep.subr.mxu0 0.0
  %871 = vmatpush2.msra.mxu0 0.0
  %872 = vmatprep.mubr.f32.mxu0 0.0
  %873 = vmatmul.mubr.f32.gmra.mxu0 %v794
  %v874 = vpop.f32.mrf.mxu0
  %v875 = vadd.f32 %v776, %v874
  %v876 = vpop.f32.mrf.mxu0
  %877 = vmatprep.mubr.f32.mxu0 0.0
  %878 = vmatmul.mubr.f32.gmra.mxu0 %v797
  %v879 = vpop.f32.mrf.mxu0
  %v880 = vadd.f32 %v781, %v879
  %v881 = vpop.f32.mrf.mxu0
  %882 = vmatprep.mubr.f32.mxu0 0.0
  %883 = vmatmul.mubr.f32.gmra.mxu0 %v800
  %v884 = vpop.f32.mrf.mxu0
  %v885 = vadd.f32 %v786, %v884
  %v886 = vpop.f32.mrf.mxu0
  %887 = vmatprep.mubr.f32.mxu0 0.0
  %888 = vmatmul.mubr.f32.gmra.mxu0 %v803
  %v889 = vpop.f32.mrf.mxu0
  %v890 = vadd.f32 %v791, %v889
  %v891 = vpop.f32.mrf.mxu0
  %892 = vdwg.mxu0
  %893 = vst [vmem:[%s11] sm:$0xff] %v875
  %894 = vst [vmem:[%s11 + $0x8] sm:$0xff] %v880
  %895 = vst [vmem:[%s11 + $0x10] sm:$0xff] %v885
  %896 = vst [vmem:[%s11 + $0x18] sm:$0x3] %v890
  // Predicated region
  $region46: #{mymodel_forward.1} parent=0 // pred_check
    _
  $region47: #{mymodel_forward.1} parent=0 // pred_check_branch
    %898 = sbr.rel (0) target = $region49
  $region48: #{mymodel_forward.1} parent=0 // pred_region
    _
  $region49: #{mymodel_forward.1} parent=0 // pred_fallthru
    _
  // Predicated region
  $region50: #{mymodel_forward.1} parent=0 // pred_check
    _
  $region51: #{mymodel_forward.1} parent=0 // pred_check_branch
    %900 = sbr.rel (0) target = $region53
  $region52: #{mymodel_forward.1} parent=0 // pred_region
    _
  $region53: #{mymodel_forward.1} parent=0 // pred_fallthru
    _

</llo_original>
